<compile_context>
chip_gen: v7x
topology: tpu7x:2x2x1
jax: 0.10.0
libtpu: 0.0.40
codegen_flags: <defaults>
</compile_context>

<pallas_src>
import math

import jax
import jax.numpy as jnp
from jax.experimental import pallas as pl
from jax.experimental.pallas import tpu as pltpu


def _round_up(v, m):
    return ((v + m - 1) // m) * m


def _make_kernel(kk, tb, kp, cp):
    def soft_gate_kernel(patches_ref, w1_ref, b1_ref, w2_ref, b2_ref, logprob_ref):
        # (KK, TB, Kp) -> (KK*TB, Kp): TB % 8 == 0 and the lane dim is untouched,
        # so this leading-dim collapse is layout-preserving (no relayout copy).
        p = patches_ref[...].reshape(kk * tb, kp)
        # conv3x3(stride 2, pad 1) with BN folded in, for all k*k pooled-window
        # positions and TB samples in ONE well-filled MXU pass (M = KK*TB).
        conv = jnp.dot(p, w1_ref[...], preferred_element_type=jnp.float32)   # (KK*TB, Cp)
        act = jnp.maximum(conv + b1_ref[...], 0.0)                           # bias bcast once
        # AvgPool2d = sum over the k*k window positions (1/(k*k) folded into w2).
        pooled = jnp.sum(act.reshape(kk, tb, cp), axis=0)                    # (TB, Cp) VPU adds
        # 1x1 conv head, lane-dense: padded output lanes carry a -1e30 bias so they
        # behave as -inf logits and vanish from the logsoftmax normalizer.
        logits = jnp.dot(pooled, w2_ref[...],
                         preferred_element_type=jnp.float32) + b2_ref[...]   # (TB, 128)
        m = jnp.max(logits, axis=-1, keepdims=True)
        z = logits - m
        logprob_ref[...] = z - jnp.log(jnp.sum(jnp.exp(z), axis=-1, keepdims=True))

    return soft_gate_kernel


def _pick_batch_tile(n, kk, kp, cp):
    """Pick TB: fill the MXU M dimension, stay inside a conservative VMEM budget
    (safe on v5e/v6e/v7x), and keep >= 2 grid steps when the batch allows it so
    v7x's two TensorCores both get work."""
    budget = 24 << 20
    fixed = 2 * kp * cp * 2 + 2 * cp * 128 * 4 + 2 * 8 * (cp + 128) * 4
    per_row = 2 * (kk * kp * 2 + 128 * 4)                    # double-buffered patches + out
    avail = max(budget - fixed, 1 << 20)
    tb = min(256, max(8, (avail // per_row) // 8 * 8))
    n8 = _round_up(max(n, 1), 8)
    if n8 <= tb:                                             # whole batch fits one tile
        tb = _round_up((n8 + 1) // 2, 8) if n8 >= 16 else n8  # >=2 steps when worthwhile
    return tb


def soft_gate_ii_forward(x, params, pool_size=5):
    """x: (N, C, H, W) float32 (NCHW, like PyTorch). Returns (gate, logprob), eval mode."""
    N, C, H, W = x.shape
    OH = (H + 2 - 3) // 2 + 1
    OW = (W + 2 - 3) // 2 + 1
    k = int(math.floor(pool_size / 2 + 0.5))                 # AvgPool2d kernel & stride
    PH = (OH - k) // k + 1
    PW = (OW - k) // k + 1
    assert PH == 1 and PW == 1, "SoftGateII expects the pooled output to be 1x1"
    assert N > 1, "N must be > 1 so .squeeze() keeps the batch dim (like PyTorch)"
    KK = k * k

    Kp = _round_up(9 * C, 128)                               # matmul K dim (lane-padded)
    Cp = _round_up(C, 128)                                   # conv-output channel dim
    TB = _pick_batch_tile(N, KK, Kp, Cp)
    NB = _round_up(N, TB)

    # ---- glue: im2col of ONLY the k x k conv-output window the pool reads --------
    # Only the top-left (2k x 2k) input region matters; crop BEFORE the NHWC
    # transpose / pad so those passes touch a window-sized tensor, not the full x.
    hh, ww = min(H, 2 * k), min(W, 2 * k)
    x_win = jnp.transpose(x[:, :, :hh, :ww], (0, 2, 3, 1))               # (N, hh, ww, C)
    x_pad = jnp.pad(x_win, ((0, 0), (1, 2 * k - hh), (1, 2 * k - ww), (0, 0)))
    rows = []
    for ph in range(k):                                                  # conv output (ph, pw)
        for pw in range(k):
            taps = [x_pad[:, 2 * ph + kh, 2 * pw + kw, :]                # (N, C) each
                    for kh in range(3) for kw in range(3)]
            rows.append(jnp.concatenate(taps, axis=-1))                  # (N, 9C)  [kh,kw,ci]
    patches = jnp.stack(rows, axis=0)                                    # (KK, N, 9C) pos-major
    patches = jnp.pad(patches, ((0, 0), (0, NB - N), (0, Kp - 9 * C)))
    patches = patches.astype(jnp.bfloat16)                               # (KK, NB, Kp)

    # ---- glue: fold BatchNorm (eval, eps=1e-5) into conv weight + bias -----------
    scale = params["bn_gamma"] * jax.lax.rsqrt(params["bn_var"] + 1e-5)  # (C,)
    b1 = (params["bn_beta"] - params["bn_mean"] * scale).reshape(1, C)
    # conv weight OIHW -> (kh, kw, cin, cout) -> (9*C, C), matching patch-row order
    w1 = jnp.transpose(params["w_conv"], (2, 3, 1, 0)).reshape(9 * C, C) * scale[None, :]
    w1 = jnp.pad(w1, ((0, Kp - 9 * C), (0, Cp - C))).astype(jnp.bfloat16)      # (Kp, Cp)
    b1 = jnp.pad(b1, ((0, 0), (0, Cp - C))).astype(jnp.float32)                # (1, Cp)
    # 1x1 conv head: fold the 1/(k*k) avg-pool scale into the weight; pad to 128
    # output lanes for a lane-dense store; padded lanes get a -1e30 bias (== -inf).
    w2 = (params["w_lin"].reshape(2, C).T * (1.0 / float(KK))).astype(jnp.float32)
    w2 = jnp.pad(w2, ((0, Cp - C), (0, 128 - 2)))                              # (Cp, 128)
    b2 = jnp.pad(params["b_lin"].reshape(1, 2).astype(jnp.float32),
                 ((0, 0), (0, 128 - 2)), constant_values=-1e30)                # (1, 128)

    vmem_est = (2 * KK * TB * Kp * 2 + 2 * Kp * Cp * 2 + 2 * 8 * Cp * 4
                + 2 * Cp * 128 * 4 + 2 * 8 * 128 * 4 + 2 * TB * 128 * 4)
    vmem_limit = int(min(max(vmem_est * 5 // 4, 16 << 20), 48 << 20))          # v7x-safe

    grid = (NB // TB,)
    logprob_full = pl.pallas_call(
        _make_kernel(KK, TB, Kp, Cp),
        out_shape=jax.ShapeDtypeStruct((NB, 128), jnp.float32),
        grid=grid,
        in_specs=[
            pl.BlockSpec((KK, TB, Kp), lambda i: (0, i, 0)),   # patches: batch-tiled
            pl.BlockSpec((Kp, Cp), lambda i: (0, 0)),          # conv weight (BN folded)
            pl.BlockSpec((1, Cp), lambda i: (0, 0)),           # conv/BN bias
            pl.BlockSpec((Cp, 128), lambda i: (0, 0)),         # 1x1 head weight (pool folded)
            pl.BlockSpec((1, 128), lambda i: (0, 0)),          # head bias + -inf lane mask
        ],
        out_specs=pl.BlockSpec((TB, 128), lambda i: (i, 0)),   # lane-dense output block
        compiler_params=pltpu.CompilerParams(
            dimension_semantics=("parallel",),
            vmem_limit_bytes=vmem_limit),
    )(patches, w1, b1, w2, b2)

    logprob = logprob_full[:N, :2]                             # drop batch / lane padding
    # eval-mode hard gate: softmax[:,1] > 0.5  <=>  logsoftmax[:,1] > log(0.5)
    # TODO(synk): training-mode path returns the soft probability instead of the hard gate.
    gate = (logprob[:, 1] > jnp.float32(math.log(0.5))).astype(jnp.float32)
    gate = gate.reshape(N, 1, 1, 1)                            # x.view(N, 1, 1, 1)
    return gate, logprob


if __name__ == "__main__":
    key = jax.random.PRNGKey(0)
    N, C, pool_size = 2, 10, 5
    H = W = 2 * pool_size   # conv stride-2 -> 5x5, AvgPool2d(3) -> 1x1

    keys = jax.random.split(key, 8)
    x = jax.random.normal(keys[0], (N, C, H, W), jnp.float32)

    # deterministic synthetic parameters (shapes from SoftGateII.__init__)
    params = dict(
        w_conv=0.1 * jax.random.normal(keys[1], (C, C, 3, 3), jnp.float32),  # conv3x3, no bias
        bn_gamma=1.0 + 0.1 * jax.random.normal(keys[2], (C,), jnp.float32),
        bn_beta=0.1 * jax.random.normal(keys[3], (C,), jnp.float32),
        bn_mean=0.1 * jax.random.normal(keys[4], (C,), jnp.float32),
        bn_var=jax.random.uniform(keys[5], (C,), jnp.float32, 0.5, 1.5),
        w_lin=0.1 * jax.random.normal(keys[6], (2, C, 1, 1), jnp.float32),   # 1x1 conv
        b_lin=0.1 * jax.random.normal(keys[7], (2,), jnp.float32),
    )

    gate, logprob = soft_gate_ii_forward(x, params, pool_size=pool_size)
    jax.block_until_ready((gate, logprob))
    assert gate.shape == (N, 1, 1, 1) and logprob.shape == (N, 2)
    print("KERNEL_OK")
</pallas_src>

<mosaic_0001>
module attributes {stable_mosaic.version = 11 : i64} {
  func.func @soft_gate_kernel(%arg0: i32, %arg1: memref<9x8x128xbf16, #tpu.memory_space<vmem>>, %arg2: memref<128x128xbf16, #tpu.memory_space<vmem>>, %arg3: memref<1x128xf32, #tpu.memory_space<vmem>>, %arg4: memref<128x128xf32, #tpu.memory_space<vmem>>, %arg5: memref<1x128xf32, #tpu.memory_space<vmem>>, %arg6: memref<8x128xf32, #tpu.memory_space<vmem>>) attributes {dimension_semantics = [#tpu.dimension_semantics<parallel>], iteration_bounds = array<i64: 1>, scalar_prefetch = 0 : i64, scratch_operands = 0 : i64, tpu.core_type = #tpu.core_type<tc>, window_params = [{transform_indices = @transform_0, window_bounds = array<i64: 9, 8, 128>}, {pipeline_mode = #tpu.pipeline_mode<synchronous>, transform_indices = @transform_1, window_bounds = array<i64: 128, 128>}, {pipeline_mode = #tpu.pipeline_mode<synchronous>, transform_indices = @transform_2, window_bounds = array<i64: 1, 128>}, {pipeline_mode = #tpu.pipeline_mode<synchronous>, transform_indices = @transform_3, window_bounds = array<i64: 128, 128>}, {pipeline_mode = #tpu.pipeline_mode<synchronous>, transform_indices = @transform_4, window_bounds = array<i64: 1, 128>}, {transform_indices = @transform_5, window_bounds = array<i64: 8, 128>}]} {
    %c0 = arith.constant 0 : index
    %c0_0 = arith.constant 0 : index
    %c0_1 = arith.constant 0 : index
    %0 = vector.load %arg1[%c0, %c0_0, %c0_1] : memref<9x8x128xbf16, #tpu.memory_space<vmem>>, vector<9x8x128xbf16>
    %1 = vector.shape_cast %0 : vector<9x8x128xbf16> to vector<72x128xbf16>
    %c0_2 = arith.constant 0 : index
    %c0_3 = arith.constant 0 : index
    %2 = vector.load %arg2[%c0_2, %c0_3] : memref<128x128xbf16, #tpu.memory_space<vmem>>, vector<128x128xbf16>
    %cst = arith.constant dense<0.000000e+00> : vector<72x128xf32>
    %3 = tpu.matmul %1, %2, %cst {dimension_numbers = #tpu.dot_dimension_numbers<[1], [0], [0], [1], [0, 0, 1, 1], [], []>} : vector<72x128xbf16>, vector<128x128xbf16>, vector<72x128xf32> -> vector<72x128xf32>
    %c0_4 = arith.constant 0 : index
    %c0_5 = arith.constant 0 : index
    %4 = vector.load %arg3[%c0_4, %c0_5] : memref<1x128xf32, #tpu.memory_space<vmem>>, vector<1x128xf32>
    %5 = vector.broadcast %4 : vector<1x128xf32> to vector<72x128xf32>
    %6 = arith.addf %3, %5 : vector<72x128xf32>
    %cst_6 = arith.constant 0.000000e+00 : f32
    %7 = vector.broadcast %cst_6 : f32 to vector<72x128xf32>
    %8 = arith.maximumf %6, %7 : vector<72x128xf32>
    %9 = vector.shape_cast %8 : vector<72x128xf32> to vector<9x8x128xf32>
    %cst_7 = arith.constant dense<0.000000e+00> : vector<8x128xf32>
    %10 = vector.multi_reduction <add>, %9, %cst_7 [0] : vector<9x8x128xf32> to vector<8x128xf32>
    %c0_8 = arith.constant 0 : index
    %c0_9 = arith.constant 0 : index
    %11 = vector.load %arg4[%c0_8, %c0_9] : memref<128x128xf32, #tpu.memory_space<vmem>>, vector<128x128xf32>
    %cst_10 = arith.constant dense<0.000000e+00> : vector<8x128xf32>
    %12 = tpu.matmul %10, %11, %cst_10 {dimension_numbers = #tpu.dot_dimension_numbers<[1], [0], [0], [1], [0, 0, 1, 1], [], []>} : vector<8x128xf32>, vector<128x128xf32>, vector<8x128xf32> -> vector<8x128xf32>
    %c0_11 = arith.constant 0 : index
    %c0_12 = arith.constant 0 : index
    %13 = vector.load %arg5[%c0_11, %c0_12] : memref<1x128xf32, #tpu.memory_space<vmem>>, vector<1x128xf32>
    %14 = vector.broadcast %13 : vector<1x128xf32> to vector<8x128xf32>
    %15 = arith.addf %12, %14 : vector<8x128xf32>
    %cst_13 = arith.constant dense<0xFF800000> : vector<8xf32>
    %16 = vector.multi_reduction <maximumf>, %15, %cst_13 [1] : vector<8x128xf32> to vector<8xf32>
    %17 = vector.shape_cast %16 : vector<8xf32> to vector<8x1xf32>
    %18 = vector.broadcast %17 : vector<8x1xf32> to vector<8x128xf32>
    %19 = arith.subf %15, %18 : vector<8x128xf32>
    %20 = math.exp %19 : vector<8x128xf32>
    %cst_14 = arith.constant dense<0.000000e+00> : vector<8xf32>
    %21 = vector.multi_reduction <add>, %20, %cst_14 [1] : vector<8x128xf32> to vector<8xf32>
    %22 = vector.shape_cast %21 : vector<8xf32> to vector<8x1xf32>
    %23 = math.log %22 : vector<8x1xf32>
    %24 = vector.broadcast %23 : vector<8x1xf32> to vector<8x128xf32>
    %25 = arith.subf %19, %24 : vector<8x128xf32>
    %c0_15 = arith.constant 0 : index
    %c0_16 = arith.constant 0 : index
    %26 = vector.load %arg6[%c0_15, %c0_16] : memref<8x128xf32, #tpu.memory_space<vmem>>, vector<8x128xf32>
    tpu.vector_store %arg6[%c0_15, %c0_16], %25 {strides = array<i32>} : memref<8x128xf32, #tpu.memory_space<vmem>>, vector<8x128xf32>,
    return
  }
  func.func @transform_0(%arg0: i32) -> (i32, i32, i32) {
    %c0_i32 = arith.constant 0 : i32
    %c0_i32_0 = arith.constant 0 : i32
    %c0_i32_1 = arith.constant 0 : i32
    return %c0_i32, %arg0, %c0_i32_0 : i32, i32, i32
  }
  func.func @transform_1(%arg0: i32) -> (i32, i32) {
    %c0_i32 = arith.constant 0 : i32
    %c0_i32_0 = arith.constant 0 : i32
    %c0_i32_1 = arith.constant 0 : i32
    return %c0_i32, %c0_i32_0 : i32, i32
  }
  func.func @transform_2(%arg0: i32) -> (i32, i32) {
    %c0_i32 = arith.constant 0 : i32
    %c0_i32_0 = arith.constant 0 : i32
    %c0_i32_1 = arith.constant 0 : i32
    return %c0_i32, %c0_i32_0 : i32, i32
  }
  func.func @transform_3(%arg0: i32) -> (i32, i32) {
    %c0_i32 = arith.constant 0 : i32
    %c0_i32_0 = arith.constant 0 : i32
    %c0_i32_1 = arith.constant 0 : i32
    return %c0_i32, %c0_i32_0 : i32, i32
  }
  func.func @transform_4(%arg0: i32) -> (i32, i32) {
    %c0_i32 = arith.constant 0 : i32
    %c0_i32_0 = arith.constant 0 : i32
    %c0_i32_1 = arith.constant 0 : i32
    return %c0_i32, %c0_i32_0 : i32, i32
  }
  func.func @transform_5(%arg0: i32) -> (i32, i32) {
    %c0_i32 = arith.constant 0 : i32
    %c0_i32_0 = arith.constant 0 : i32
    return %arg0, %c0_i32 : i32, i32
  }
}

</mosaic_0001>

<llo_original>
// kernel: tpu_custom_call.1
$region0: #{tpu_custom_call.1}
  #allocation0 [shape = 'u32[]', space=smem, size = 0x4, offset = 0x4, fixed_abs, tag = 'smem constant byte address 0x4 - core index']
  #allocation1 [shape = 'u32[144,128]{1,0:T(1,128)}', space=vmem, size = 0x12000, scoped, tag = 'internal scratch']
  %s0 = inlined_call_operand.hbm [shape: bf16[9,8,128], index: 0, kind: input, shape index: {}]
  %s1 = inlined_call_operand.hbm [shape: bf16[128,128], index: 1, kind: input, shape index: {}]
  %s2 = inlined_call_operand.vmem [shape: f32[1,128], index: 2, kind: input, shape index: {}]
  %s3 = inlined_call_operand.hbm [shape: f32[128,128], index: 3, kind: input, shape index: {}]
  %s4 = inlined_call_operand.vmem [shape: f32[1,128], index: 4, kind: input, shape index: {}]
  %s5 = inlined_call_operand.hbm [shape: f32[8,128], index: 5, kind: output, shape index: {}]
  %s6 = sld [smem:[#allocation0]]
  $region42: #{tpu_custom_call.1} parent=0
    _
  %s8 = ssub.s32 1, %s6
  %s9 = scalar_select 0, %s8, %s6
  $region1: #{tpu_custom_call.1} parent=0
    #allocation2 [shape = 'u8[18432]{0}', space=vmem, size = 0x4800, scoped, tag = 'input window, operand 0, single buffered']
    #allocation3 [shape = 's32[1]{0}', space=sflag, size = 0x4, scoped, tag = 'scoped memory for tpu_custom_call.1']
    #allocation4 [shape = 's32[1]{0}', space=sflag, size = 0x4, scoped, tag = 'scoped memory for tpu_custom_call.1']
    #allocation5 [shape = 'u8[32768]{0}', space=vmem, size = 0x8000, scoped, tag = 'input window, operand 1, single buffered']
    #allocation6 [shape = 's32[1]{0}', space=sflag, size = 0x4, scoped, tag = 'scoped memory for tpu_custom_call.1']
    #allocation7 [shape = 'u8[65536]{0}', space=vmem, size = 0x10000, scoped, tag = 'input window, operand 3, single buffered']
    #allocation8 [shape = 'u8[4096]{0}', space=vmem, size = 0x1000, scoped, tag = 'output window, operand 0, single buffered']
    %10 = vsyncpa [#allocation3], 0
    %11 = vsyncpa [#allocation6], 0
    %12 = vsyncpa [#allocation4], 0
    // Predicated region
    $region2: #{tpu_custom_call.1} parent=1 // pred_check
      _
    $region3: #{tpu_custom_call.1} parent=1 // pred_check_branch
      %14 = sbr.rel (0) target = $region5
    $region4: #{tpu_custom_call.1} parent=1 // pred_region
      %s16 = ssub.s32 576, 576
      %17 = vsyncadd [#allocation3], %s16
      %s18 = sshll.u32 [#allocation2], 4
      %s19 = int_to_ptr.vmem [resolvable:$true] %s18
      %24 = dma.hbm_to_vmem [thread:$0]  %s0, 576, %s19, [#allocation3], 64, 64, 4
    $region5: #{tpu_custom_call.1} parent=1 // pred_fallthru
      _
    // Predicated region
    $region6: #{tpu_custom_call.1} parent=1 // pred_check
      _
    $region7: #{tpu_custom_call.1} parent=1 // pred_check_branch
      %26 = sbr.rel (0) target = $region9
    $region8: #{tpu_custom_call.1} parent=1 // pred_region
      %s28 = ssub.s32 1024, 1024
      %29 = vsyncadd [#allocation6], %s28
      %s30 = sshll.u32 [#allocation5], 4
      %s31 = int_to_ptr.vmem [resolvable:$true] %s30
      %36 = dma.hbm_to_vmem [thread:$0]  %s1, 1024, %s31, [#allocation6], 64, 64, 4
    $region9: #{tpu_custom_call.1} parent=1 // pred_fallthru
      _
    // Predicated region
    $region10: #{tpu_custom_call.1} parent=1 // pred_check
      _
    $region11: #{tpu_custom_call.1} parent=1 // pred_check_branch
      %38 = sbr.rel (0) target = $region13
    $region12: #{tpu_custom_call.1} parent=1 // pred_region
      _
    $region13: #{tpu_custom_call.1} parent=1 // pred_fallthru
      _
    // Predicated region
    $region14: #{tpu_custom_call.1} parent=1 // pred_check
      _
    $region15: #{tpu_custom_call.1} parent=1 // pred_check_branch
      %40 = sbr.rel (0) target = $region17
    $region16: #{tpu_custom_call.1} parent=1 // pred_region
      %s42 = ssub.s32 2048, 2048
      %43 = vsyncadd [#allocation6], %s42
      %s44 = sshll.u32 [#allocation7], 4
      %s45 = int_to_ptr.vmem [resolvable:$true] %s44
      %50 = dma.hbm_to_vmem [thread:$0]  %s3, 2048, %s45, [#allocation6], 128, 128, 8
    $region17: #{tpu_custom_call.1} parent=1 // pred_fallthru
      _
    // Predicated region
    $region18: #{tpu_custom_call.1} parent=1 // pred_check
      _
    $region19: #{tpu_custom_call.1} parent=1 // pred_check_branch
      %52 = sbr.rel (0) target = $region21
    $region20: #{tpu_custom_call.1} parent=1 // pred_region
      _
    $region21: #{tpu_custom_call.1} parent=1 // pred_fallthru
      _
    // Predicated region
    $region22: #{tpu_custom_call.1} parent=1 // pred_check
      _
    $region23: #{tpu_custom_call.1} parent=1 // pred_check_branch
      %54 = sbr.rel (0) target = $region25
    $region24: #{tpu_custom_call.1} parent=1 // pred_region
      %55 = dma.done [#allocation3], 576
    $region25: #{tpu_custom_call.1} parent=1 // pred_fallthru
      _
    // Predicated region
    $region26: #{tpu_custom_call.1} parent=1 // pred_check
      _
    $region27: #{tpu_custom_call.1} parent=1 // pred_check_branch
      %57 = sbr.rel (0) target = $region29
    $region28: #{tpu_custom_call.1} parent=1 // pred_region
      %58 = dma.done [#allocation6], 1024
    $region29: #{tpu_custom_call.1} parent=1 // pred_fallthru
      _
    // Predicated region
    $region30: #{tpu_custom_call.1} parent=1 // pred_check
      _
    $region31: #{tpu_custom_call.1} parent=1 // pred_check_branch
      %60 = sbr.rel (0) target = $region33
    $region32: #{tpu_custom_call.1} parent=1 // pred_region
      %61 = dma.done [#allocation6], 2048
    $region33: #{tpu_custom_call.1} parent=1 // pred_fallthru
      _
    %v63 = vld [vmem:[#allocation2] sm:$0xf]
    %v64 = vld [vmem:[#allocation2 + $0x4] sm:$0xf]
    %v65 = vld [vmem:[#allocation2 + $0x8] sm:$0xf]
    %v66 = vld [vmem:[#allocation2 + $0xc] sm:$0xf]
    %v67 = vld [vmem:[#allocation2 + $0x10] sm:$0xf]
    %v68 = vld [vmem:[#allocation2 + $0x14] sm:$0xf]
    %v69 = vld [vmem:[#allocation2 + $0x18] sm:$0xf]
    %v70 = vld [vmem:[#allocation2 + $0x1c] sm:$0xf]
    %v71 = vld [vmem:[#allocation2 + $0x20] sm:$0xf]
    %v72 = vld [vmem:[#allocation5] sm:$0xf]
    %v73 = vld [vmem:[#allocation5 + $0x4] sm:$0xf]
    %v74 = vld [vmem:[#allocation5 + $0x8] sm:$0xf]
    %v75 = vld [vmem:[#allocation5 + $0xc] sm:$0xf]
    %v76 = vld [vmem:[#allocation5 + $0x10] sm:$0xf]
    %v77 = vld [vmem:[#allocation5 + $0x14] sm:$0xf]
    %v78 = vld [vmem:[#allocation5 + $0x18] sm:$0xf]
    %v79 = vld [vmem:[#allocation5 + $0x1c] sm:$0xf]
    %v80 = vld [vmem:[#allocation5 + $0x20] sm:$0xf]
    %v81 = vld [vmem:[#allocation5 + $0x24] sm:$0xf]
    %v82 = vld [vmem:[#allocation5 + $0x28] sm:$0xf]
    %v83 = vld [vmem:[#allocation5 + $0x2c] sm:$0xf]
    %v84 = vld [vmem:[#allocation5 + $0x30] sm:$0xf]
    %v85 = vld [vmem:[#allocation5 + $0x34] sm:$0xf]
    %v86 = vld [vmem:[#allocation5 + $0x38] sm:$0xf]
    %v87 = vld [vmem:[#allocation5 + $0x3c] sm:$0xf]
    %v88 = vld [vmem:[%s2] sm:$0x1]
    %v90 = vlaneseq
    %v91 = vshrl.u32 %v90, 7
    %v92 = vsub.s32 0, %v91
    %v93 = vrot.slane %v88, %v92
    %v104 = vunpack.c.l.b16 %v63
    %v105 = vunpack.c.l.b16 %v64
    %v106 = vunpack.c.l.b16 %v65
    %v107 = vunpack.c.l.b16 %v66
    %v108 = vunpack.c.l.b16 %v67
    %v109 = vunpack.c.l.b16 %v68
    %v110 = vunpack.c.l.b16 %v69
    %v111 = vunpack.c.l.b16 %v70
    %v112 = vunpack.c.l.b16 %v71
    %v113 = vpack.c.b16 %v105, %v104
    %v114 = vpack.c.b16 %v107, %v106
    %v115 = vpack.c.b16 %v109, %v108
    %v116 = vpack.c.b16 %v111, %v110
    %v117 = vpack.c.b16 %v112, %v112
    %v139 = vunpack.c.l.b16 %v72
    %v140 = vunpack.c.l.b16 %v73
    %v141 = vunpack.c.l.b16 %v74
    %v142 = vunpack.c.l.b16 %v75
    %v143 = vunpack.c.l.b16 %v76
    %v144 = vunpack.c.l.b16 %v77
    %v145 = vunpack.c.l.b16 %v78
    %v146 = vunpack.c.l.b16 %v79
    %v147 = vunpack.c.l.b16 %v80
    %v148 = vunpack.c.l.b16 %v81
    %v149 = vunpack.c.l.b16 %v82
    %v150 = vunpack.c.l.b16 %v83
    %v151 = vunpack.c.l.b16 %v84
    %v152 = vunpack.c.l.b16 %v85
    %v153 = vunpack.c.l.b16 %v86
    %v154 = vunpack.c.l.b16 %v87
    %v155 = vpack.c.b16 %v140, %v139
    %v156 = vpack.c.b16 %v142, %v141
    %v157 = vpack.c.b16 %v144, %v143
    %v158 = vpack.c.b16 %v146, %v145
    %v159 = vpack.c.b16 %v148, %v147
    %v160 = vpack.c.b16 %v150, %v149
    %v161 = vpack.c.b16 %v152, %v151
    %v162 = vpack.c.b16 %v154, %v153
    %171 = vmatprep.subr.bf16.mxu0 0
    %172 = vmatpush1.bf16.msra.mxu0 %v155
    %173 = vmatprep.subr.bf16.mxu0 0
    %174 = vmatpush1.bf16.msra.mxu0 %v156
    %175 = vmatprep.subr.bf16.mxu0 0
    %176 = vmatpush1.bf16.msra.mxu0 %v157
    %177 = vmatprep.subr.bf16.mxu0 0
    %178 = vmatpush1.bf16.msra.mxu0 %v158
    %179 = vmatprep.subr.bf16.mxu0 0
    %180 = vmatpush1.bf16.msra.mxu0 %v159
    %181 = vmatprep.subr.bf16.mxu0 0
    %182 = vmatpush1.bf16.msra.mxu0 %v160
    %183 = vmatprep.subr.bf16.mxu0 0
    %184 = vmatpush1.bf16.msra.mxu0 %v161
    %185 = vmatprep.subr.bf16.mxu0 0
    %186 = vmatpush1.bf16.msra.mxu0 %v162
    %187 = vmatprep.subr.bf16.mxu0 0
    %188 = vmatpush1.bf16.msra.mxu0 0
    %189 = vmatprep.subr.bf16.mxu0 0
    %190 = vmatpush1.bf16.msra.mxu0 0
    %191 = vmatprep.subr.bf16.mxu0 0
    %192 = vmatpush1.bf16.msra.mxu0 0
    %193 = vmatprep.subr.bf16.mxu0 0
    %194 = vmatpush1.bf16.msra.mxu0 0
    %195 = vmatprep.subr.bf16.mxu0 0
    %196 = vmatpush1.bf16.msra.mxu0 0
    %197 = vmatprep.subr.bf16.mxu0 0
    %198 = vmatpush1.bf16.msra.mxu0 0
    %199 = vmatprep.subr.bf16.mxu0 0
    %200 = vmatpush1.bf16.msra.mxu0 0
    %201 = vmatprep.subr.bf16.mxu0 0
    %202 = vmatpush1.bf16.msra.mxu0 0
    %203 = vmatprep.mubr.bf16.mxu0 0
    %204 = vmatmul.mubr.bf16.gmra.mrb[0].mxu0 %v113
    %v205 = vpop.f32.mrb[0].mxu0
    %v206 = vadd.f32 %v93, %v205
    %v207 = vpop.f32.mrb[0].mxu0
    %v208 = vpop.f32.mrb[0].mxu0
    %v209 = vadd.f32 %v93, %v208
    %v210 = vpop.f32.mrb[0].mxu0
    %211 = vmatprep.mubr.bf16.mxu0 0
    %212 = vmatmul.mubr.bf16.gmra.mrb[0].mxu0 %v114
    %v213 = vpop.f32.mrb[0].mxu0
    %v214 = vadd.f32 %v93, %v213
    %v215 = vpop.f32.mrb[0].mxu0
    %v216 = vpop.f32.mrb[0].mxu0
    %v217 = vadd.f32 %v93, %v216
    %v218 = vpop.f32.mrb[0].mxu0
    %219 = vmatprep.mubr.bf16.mxu0 0
    %220 = vmatmul.mubr.bf16.gmra.mrb[0].mxu0 %v115
    %v221 = vpop.f32.mrb[0].mxu0
    %v222 = vadd.f32 %v93, %v221
    %v223 = vpop.f32.mrb[0].mxu0
    %v224 = vpop.f32.mrb[0].mxu0
    %v225 = vadd.f32 %v93, %v224
    %v226 = vpop.f32.mrb[0].mxu0
    %227 = vmatprep.mubr.bf16.mxu0 0
    %228 = vmatmul.mubr.bf16.gmra.mrb[0].mxu0 %v116
    %v229 = vpop.f32.mrb[0].mxu0
    %v230 = vadd.f32 %v93, %v229
    %v231 = vpop.f32.mrb[0].mxu0
    %v232 = vpop.f32.mrb[0].mxu0
    %v233 = vadd.f32 %v93, %v232
    %v234 = vpop.f32.mrb[0].mxu0
    %235 = vmatprep.mubr.bf16.mxu0 0
    %236 = vmatmul.mubr.bf16.gmra.mrb[0].mxu0 %v117
    %v237 = vpop.f32.mrb[0].mxu0
    %v238 = vadd.f32 %v93, %v237
    %v239 = vpop.f32.mrb[0].mxu0
    %v240 = vpop.f32.mrb[0].mxu0
    %v241 = vpop.f32.mrb[0].mxu0
    %242 = vdwg.mxu0
    %v243 = vmax.f32 %v206, 0.0
    %v244 = vmax.f32 %v209, 0.0
    %v245 = vmax.f32 %v214, 0.0
    %v246 = vmax.f32 %v217, 0.0
    %v247 = vmax.f32 %v222, 0.0
    %v248 = vmax.f32 %v225, 0.0
    %v249 = vmax.f32 %v230, 0.0
    %v250 = vmax.f32 %v233, 0.0
    %v251 = vmax.f32 %v238, 0.0
    %v252 = vadd.f32 %v243, %v244
    %v253 = vadd.f32 %v252, %v245
    %v254 = vadd.f32 %v253, %v246
    %v255 = vadd.f32 %v254, %v247
    %v256 = vadd.f32 %v255, %v248
    %v257 = vadd.f32 %v256, %v249
    %v258 = vadd.f32 %v257, %v250
    %v259 = vadd.f32 %v258, %v251
    %v260 = vld [vmem:[#allocation7] sm:$0xff]
    %v261 = vld [vmem:[#allocation7 + $0x8] sm:$0xff]
    %v262 = vld [vmem:[#allocation7 + $0x10] sm:$0xff]
    %v263 = vld [vmem:[#allocation7 + $0x18] sm:$0xff]
    %v264 = vld [vmem:[#allocation7 + $0x20] sm:$0xff]
    %v265 = vld [vmem:[#allocation7 + $0x28] sm:$0xff]
    %v266 = vld [vmem:[#allocation7 + $0x30] sm:$0xff]
    %v267 = vld [vmem:[#allocation7 + $0x38] sm:$0xff]
    %v268 = vld [vmem:[#allocation7 + $0x40] sm:$0xff]
    %v269 = vld [vmem:[#allocation7 + $0x48] sm:$0xff]
    %v270 = vld [vmem:[#allocation7 + $0x50] sm:$0xff]
    %v271 = vld [vmem:[#allocation7 + $0x58] sm:$0xff]
    %v272 = vld [vmem:[#allocation7 + $0x60] sm:$0xff]
    %v273 = vld [vmem:[#allocation7 + $0x68] sm:$0xff]
    %v274 = vld [vmem:[#allocation7 + $0x70] sm:$0xff]
    %v275 = vld [vmem:[#allocation7 + $0x78] sm:$0xff]
    %v276 = vld [vmem:[%s4] sm:$0x1]
    %v278 = vlaneseq
    %v279 = vshrl.u32 %v278, 7
    %v280 = vsub.s32 0, %v279
    %v281 = vrot.slane %v276, %v280
    %283 = vmatprep.subr.mxu0 0.0
    %284 = vmatpush1.msra.mxu0 %v260
    %285 = vmatprep.subr.mxu0 0.0
    %286 = vmatpush1.msra.mxu0 %v261
    %287 = vmatprep.subr.mxu0 0.0
    %288 = vmatpush1.msra.mxu0 %v262
    %289 = vmatprep.subr.mxu0 0.0
    %290 = vmatpush1.msra.mxu0 %v263
    %291 = vmatprep.subr.mxu0 0.0
    %292 = vmatpush1.msra.mxu0 %v264
    %293 = vmatprep.subr.mxu0 0.0
    %294 = vmatpush1.msra.mxu0 %v265
    %295 = vmatprep.subr.mxu0 0.0
    %296 = vmatpush1.msra.mxu0 %v266
    %297 = vmatprep.subr.mxu0 0.0
    %298 = vmatpush1.msra.mxu0 %v267
    %299 = vmatprep.subr.mxu0 0.0
    %300 = vmatpush1.msra.mxu0 %v268
    %301 = vmatprep.subr.mxu0 0.0
    %302 = vmatpush1.msra.mxu0 %v269
    %303 = vmatprep.subr.mxu0 0.0
    %304 = vmatpush1.msra.mxu0 %v270
    %305 = vmatprep.subr.mxu0 0.0
    %306 = vmatpush1.msra.mxu0 %v271
    %307 = vmatprep.subr.mxu0 0.0
    %308 = vmatpush1.msra.mxu0 %v272
    %309 = vmatprep.subr.mxu0 0.0
    %310 = vmatpush1.msra.mxu0 %v273
    %311 = vmatprep.subr.mxu0 0.0
    %312 = vmatpush1.msra.mxu0 %v274
    %313 = vmatprep.subr.mxu0 0.0
    %314 = vmatpush1.msra.mxu0 %v275
    %315 = vmatprep.subr.mxu0 0.0
    %316 = vmatpush1.msra.mxu0 0.0
    %317 = vmatprep.subr.mxu0 0.0
    %318 = vmatpush1.msra.mxu0 0.0
    %319 = vmatprep.subr.mxu0 0.0
    %320 = vmatpush1.msra.mxu0 0.0
    %321 = vmatprep.subr.mxu0 0.0
    %322 = vmatpush1.msra.mxu0 0.0
    %323 = vmatprep.subr.mxu0 0.0
    %324 = vmatpush1.msra.mxu0 0.0
    %325 = vmatprep.subr.mxu0 0.0
    %326 = vmatpush1.msra.mxu0 0.0
    %327 = vmatprep.subr.mxu0 0.0
    %328 = vmatpush1.msra.mxu0 0.0
    %329 = vmatprep.subr.mxu0 0.0
    %330 = vmatpush1.msra.mxu0 0.0
    %331 = vmatprep.subr.mxu0 0.0
    %332 = vmatpush1.msra.mxu0 0.0
    %333 = vmatprep.subr.mxu0 0.0
    %334 = vmatpush1.msra.mxu0 0.0
    %335 = vmatprep.subr.mxu0 0.0
    %336 = vmatpush1.msra.mxu0 0.0
    %337 = vmatprep.subr.mxu0 0.0
    %338 = vmatpush1.msra.mxu0 0.0
    %339 = vmatprep.subr.mxu0 0.0
    %340 = vmatpush1.msra.mxu0 0.0
    %341 = vmatprep.subr.mxu0 0.0
    %342 = vmatpush1.msra.mxu0 0.0
    %343 = vmatprep.subr.mxu0 0.0
    %344 = vmatpush1.msra.mxu0 0.0
    %345 = vmatprep.subr.mxu0 0.0
    %346 = vmatpush1.msra.mxu0 0.0
    %347 = vmatprep.mubr.f32.mxu0 0.0
    %348 = vmatmul.mubr.f32.gmra.mrb[0].mxu0 %v259
    %v349 = vpop.f32.mrb[0].mxu0
    %v350 = vadd.f32 %v281, %v349
    %v351 = vpop.f32.mrb[0].mxu0
    %352 = vdwg.mxu0
    %353 = vmax.xlane.f32.xlu0 %v350
    %v354 = vpop.xlane.xlu0 %353
    %v355 = vsub.f32 %v350, %v354
    %v356 = vmul.f32 %v355, 1.442695
    %v357 = vpow.pop %v356
    %358 = vadd.xlane.f32.xlu0 %v357
    %v359 = vpop.xlane.xlu0 %358
    %v360 = vlog2.pop %v359
    %v361 = vmul.f32 %v360, 0.6931472
    %v362 = vsub.f32 %v355, %v361
    %363 = vst [vmem:[#allocation8] sm:$0xff] %v362
    // Predicated region
    $region34: #{tpu_custom_call.1} parent=1 // pred_check
      _
    $region35: #{tpu_custom_call.1} parent=1 // pred_check_branch
      %365 = sbr.rel (0) target = $region37
    $region36: #{tpu_custom_call.1} parent=1 // pred_region
      %s367 = ssub.s32 128, 128
      %368 = vsyncadd [#allocation4], %s367
      %s370 = sshll.u32 [#allocation8], 4
      %s371 = int_to_ptr.vmem [resolvable:$true] %s370
      %373 = dma.vmem_to_hbm [thread:$0]  %s371, 128, %s5, [#allocation4]
    $region37: #{tpu_custom_call.1} parent=1 // pred_fallthru
      _
    // Predicated region
    $region38: #{tpu_custom_call.1} parent=1 // pred_check
      _
    $region39: #{tpu_custom_call.1} parent=1 // pred_check_branch
      %375 = sbr.rel (0) target = $region41
    $region40: #{tpu_custom_call.1} parent=1 // pred_region
      %376 = dma.done [#allocation4], 128
    $region41: #{tpu_custom_call.1} parent=1 // pred_fallthru
      _
    %377 = vsyncpa [#allocation3], 1
    %378 = vsyncpa [#allocation6], 1
    %379 = vsyncpa [#allocation4], 1

</llo_original>
